<compile_context>
chip_gen: v7x
topology: tpu7x:2x2x1
jax: 0.10.0
libtpu: 0.0.40
codegen_flags: <defaults>
</compile_context>

<pallas_src>
import jax
import jax.numpy as jnp
from jax.experimental import pallas as pl
from jax.experimental.pallas import tpu as pltpu


def _sigmoid_kernel(x_ref, o_ref):
    # sigmoid(x) = 0.5 * tanh(0.5 * x) + 0.5
    # tanh goes to the EUP (its own bundle slot); mul/add are cheap VPU work.
    x = x_ref[...].astype(jnp.float32)
    y = 0.5 * jnp.tanh(0.5 * x) + 0.5
    o_ref[...] = y.astype(o_ref.dtype)


_LANES = 128
# 4096 rows * 128 lanes * 4 B = 2 MiB per f32 block. Multiple of 32 sublanes,
# so the same tile is valid for f32 / bf16 / int8 packing.
_MAX_TILE_ROWS = 4096


def pallas_sigmoid(x: jax.Array) -> jax.Array:
    """Elementwise sigmoid via Pallas. Accepts any shape; returns same shape/dtype."""
    orig_shape = x.shape
    orig_dtype = x.dtype
    total = x.size

    if total == 0:
        return x

    x_flat = jnp.ravel(x)  # contiguous flatten — no HBM copy
    rem = total % _LANES
    padded_total = total if rem == 0 else total + (_LANES - rem)
    if padded_total != total:
        # Only triggers when the element count is not 128-divisible; pads the
        # tail so the slab can be viewed as [rows, 128].
        x_flat = jnp.pad(x_flat, (0, padded_total - total))
    rows = padded_total // _LANES
    x2d = x_flat.reshape(rows, _LANES)

    if rows > _MAX_TILE_ROWS:
        tr = _MAX_TILE_ROWS          # big, VMEM-safe, dtype-aligned block
    else:
        tr = rows                    # block equals full array dim (always legal)

    grid = (pl.cdiv(rows, tr),)      # last block may be partial; writes are masked

    out2d = pl.pallas_call(
        _sigmoid_kernel,
        out_shape=jax.ShapeDtypeStruct((rows, _LANES), orig_dtype),
        grid_spec=pltpu.PrefetchScalarGridSpec(
            num_scalar_prefetch=0,
            grid=grid,
            in_specs=[pl.BlockSpec((tr, _LANES), lambda i: (i, 0))],
            out_specs=pl.BlockSpec((tr, _LANES), lambda i: (i, 0)),
        ),
        compiler_params=pltpu.CompilerParams(
            dimension_semantics=("parallel",),   # lets v7x shard grid steps across its 2 TCs
        ),
    )(x2d)

    out_flat = out2d.reshape(-1)
    if padded_total != total:
        out_flat = out_flat[:total]
    return out_flat.reshape(orig_shape)


if __name__ == "__main__":
    key = jax.random.PRNGKey(0)
    # NCHW input consistent with a conv-net activation: batch=2, channels=4, 16x16 spatial.
    x = jax.random.normal(key, (2, 4, 16, 16), dtype=jnp.float32)

    out = pallas_sigmoid(x)
    out = jax.block_until_ready(out)

    # Correctness check against plain-JAX reference.
    ref = jax.nn.sigmoid(x)
    assert out.shape == x.shape and out.dtype == x.dtype
    assert jnp.max(jnp.abs(out - ref)) < 1e-5

    print("KERNEL_OK")
</pallas_src>

<mosaic_0001>
module attributes {stable_mosaic.version = 11 : i64} {
  func.func @_sigmoid_kernel(%arg0: i32, %arg1: memref<16x128xf32, #tpu.memory_space<vmem>>, %arg2: memref<16x128xf32, #tpu.memory_space<vmem>>) attributes {dimension_semantics = [#tpu.dimension_semantics<parallel>], iteration_bounds = array<i64: 1>, scalar_prefetch = 0 : i64, scratch_operands = 0 : i64, tpu.core_type = #tpu.core_type<tc>, window_params = [{transform_indices = @transform_0, window_bounds = array<i64: 16, 128>}, {transform_indices = @transform_1, window_bounds = array<i64: 16, 128>}]} {
    %c0 = arith.constant 0 : index
    %c0_0 = arith.constant 0 : index
    %0 = vector.load %arg1[%c0, %c0_0] : memref<16x128xf32, #tpu.memory_space<vmem>>, vector<16x128xf32>
    %cst = arith.constant 5.000000e-01 : f32
    %1 = vector.broadcast %cst : f32 to vector<16x128xf32>
    %2 = arith.mulf %1, %0 : vector<16x128xf32>
    %3 = math.tanh %2 : vector<16x128xf32>
    %cst_1 = arith.constant 5.000000e-01 : f32
    %4 = vector.broadcast %cst_1 : f32 to vector<16x128xf32>
    %5 = arith.mulf %4, %3 : vector<16x128xf32>
    %cst_2 = arith.constant 5.000000e-01 : f32
    %6 = vector.broadcast %cst_2 : f32 to vector<16x128xf32>
    %7 = arith.addf %5, %6 : vector<16x128xf32>
    %c0_3 = arith.constant 0 : index
    %c0_4 = arith.constant 0 : index
    %8 = vector.load %arg2[%c0_3, %c0_4] : memref<16x128xf32, #tpu.memory_space<vmem>>, vector<16x128xf32>
    tpu.vector_store %arg2[%c0_3, %c0_4], %7 {strides = array<i32>} : memref<16x128xf32, #tpu.memory_space<vmem>>, vector<16x128xf32>,
    return
  }
  func.func @transform_0(%arg0: i32) -> (i32, i32) {
    %c0_i32 = arith.constant 0 : i32
    %c0_i32_0 = arith.constant 0 : i32
    return %arg0, %c0_i32 : i32, i32
  }
  func.func @transform_1(%arg0: i32) -> (i32, i32) {
    %c0_i32 = arith.constant 0 : i32
    %c0_i32_0 = arith.constant 0 : i32
    return %arg0, %c0_i32 : i32, i32
  }
}

</mosaic_0001>

<llo_original>
// kernel: tpu_custom_call.1
$region0: #{tpu_custom_call.1}
  #allocation0 [shape = 'u32[]', space=smem, size = 0x4, offset = 0x4, fixed_abs, tag = 'smem constant byte address 0x4 - core index']
  #allocation1 [shape = 'u32[144,128]{1,0:T(1,128)}', space=vmem, size = 0x12000, scoped, tag = 'internal scratch']
  %s0 = inlined_call_operand.hbm [shape: f32[16,128], index: 0, kind: input, shape index: {}]
  %s1 = inlined_call_operand.hbm [shape: f32[16,128], index: 1, kind: output, shape index: {}]
  %s2 = sld [smem:[#allocation0]]
  $region18: #{tpu_custom_call.1} parent=0
    _
  %s4 = ssub.s32 1, %s2
  %s5 = scalar_select 0, %s4, %s2
  $region1: #{tpu_custom_call.1} parent=0
    #allocation2 [shape = 'u8[8192]{0}', space=vmem, size = 0x2000, scoped, tag = 'input window, operand 0, single buffered']
    #allocation3 [shape = 's32[1]{0}', space=sflag, size = 0x4, scoped, tag = 'scoped memory for tpu_custom_call.1']
    #allocation4 [shape = 's32[1]{0}', space=sflag, size = 0x4, scoped, tag = 'scoped memory for tpu_custom_call.1']
    #allocation5 [shape = 'u8[8192]{0}', space=vmem, size = 0x2000, scoped, tag = 'output window, operand 0, single buffered']
    %6 = vsyncpa [#allocation3], 0
    %7 = vsyncpa [#allocation4], 0
    // Predicated region
    $region2: #{tpu_custom_call.1} parent=1 // pred_check
      _
    $region3: #{tpu_custom_call.1} parent=1 // pred_check_branch
      %9 = sbr.rel (0) target = $region5
    $region4: #{tpu_custom_call.1} parent=1 // pred_region
      %s11 = ssub.s32 256, 256
      %12 = vsyncadd [#allocation3], %s11
      %s13 = sshll.u32 [#allocation2], 4
      %s14 = int_to_ptr.vmem [resolvable:$true] %s13
      %19 = dma.hbm_to_vmem [thread:$0]  %s0, 256, %s14, [#allocation3], 128, 128, 8
    $region5: #{tpu_custom_call.1} parent=1 // pred_fallthru
      _
    // Predicated region
    $region6: #{tpu_custom_call.1} parent=1 // pred_check
      _
    $region7: #{tpu_custom_call.1} parent=1 // pred_check_branch
      %21 = sbr.rel (0) target = $region9
    $region8: #{tpu_custom_call.1} parent=1 // pred_region
      %22 = dma.done [#allocation3], 256
    $region9: #{tpu_custom_call.1} parent=1 // pred_fallthru
      _
    %v23 = vld [vmem:[#allocation2] sm:$0xff]
    %v24 = vld [vmem:[#allocation2 + $0x8] sm:$0xff]
    %v25 = vmul.f32 %v23, 0.5
    %v26 = vmul.f32 %v24, 0.5
    %v27 = vtanh.pop %v25
    %v28 = vtanh.pop %v26
    %v29 = vmul.f32 %v27, 0.5
    %v30 = vmul.f32 %v28, 0.5
    %v31 = vadd.f32 %v29, 0.5
    %v32 = vadd.f32 %v30, 0.5
    %33 = vst [vmem:[#allocation5] sm:$0xff] %v31
    %34 = vst [vmem:[#allocation5 + $0x8] sm:$0xff] %v32
    // Predicated region
    $region10: #{tpu_custom_call.1} parent=1 // pred_check
      _
    $region11: #{tpu_custom_call.1} parent=1 // pred_check_branch
      %36 = sbr.rel (0) target = $region13
    $region12: #{tpu_custom_call.1} parent=1 // pred_region
      %s38 = ssub.s32 256, 256
      %39 = vsyncadd [#allocation4], %s38
      %s40 = sshll.u32 [#allocation5], 4
      %s41 = int_to_ptr.vmem [resolvable:$true] %s40
      %46 = dma.vmem_to_hbm [thread:$0]  %s41, 256, %s1, [#allocation4], 128, 128, 8
    $region13: #{tpu_custom_call.1} parent=1 // pred_fallthru
      _
    // Predicated region
    $region14: #{tpu_custom_call.1} parent=1 // pred_check
      _
    $region15: #{tpu_custom_call.1} parent=1 // pred_check_branch
      %48 = sbr.rel (0) target = $region17
    $region16: #{tpu_custom_call.1} parent=1 // pred_region
      %49 = dma.done [#allocation4], 256
    $region17: #{tpu_custom_call.1} parent=1 // pred_fallthru
      _
    %50 = vsyncpa [#allocation3], 1
    %51 = vsyncpa [#allocation4], 1

</llo_original>
